<compile_context>
chip_gen: v7x
topology: tpu7x:2x2x1
jax: 0.10.0
libtpu: 0.0.40
codegen_flags: <defaults>
</compile_context>

<pallas_src>
import functools
import math

import numpy as np

import jax
import jax.numpy as jnp
from jax.experimental import pallas as pl
from jax.experimental.pallas import tpu as pltpu


def _ffn_kernel(x_ref, wpi_ref, bpi_ref, wdw_ref, bdw_ref, wpo_ref, bpo_ref,
                m_ref, o_ref, *, H, W):
    # x_ref:   (1, C, HW)     one batch element, channels on sublanes, HW on lanes
    # wpi_ref: (hid, C)       project_in weight
    # bpi_ref: (hid, 1)
    # wdw_ref: (hid, 9)       depthwise 3x3 weights, tap index k = ky*3 + kx
    # bdw_ref: (hid, 1)
    # wpo_ref: (C, hid)       project_out weight
    # bpo_ref: (C, 1)
    # m_ref:   (9, HW)        precomputed 0/1 validity masks per tap
    # o_ref:   (1, C, HW)
    HW = H * W

    x = x_ref[0]                                            # (C, HW)

    # ---- project_in: 1x1 conv == matmul over channels (lane-dense over HW) ----
    t = jnp.dot(wpi_ref[...], x,
                preferred_element_type=jnp.float32) + bpi_ref[...]   # (hid, HW)

    # ---- depthwise 3x3 conv, padding=1: 9 rolled taps + edge masks ----
    wdw = wdw_ref[...]                                      # (hid, 9) hoisted load
    masks = m_ref[...]                                      # (9, HW)  hoisted load
    acc = t * wdw[:, 4:5]                                   # center tap (dy=0,dx=0)
    for k in range(9):
        if k == 4:
            continue
        dy = k // 3 - 1
        dx = k % 3 - 1
        off = dy * W + dx
        # rolled[p] = t[(p + off) mod HW]; wrap/row-crossing killed by the mask.
        rolled = pltpu.roll(t, shift=(-off) % HW, axis=1)   # XLU, not vld/vst
        acc = acc + (rolled * masks[k:k + 1, :]) * wdw[:, k:k + 1]
    acc = acc + bdw_ref[...]

    # ---- exact (erf) GELU, matching F.gelu default ----
    g = 0.5 * acc * (1.0 + jax.lax.erf(acc * (1.0 / math.sqrt(2.0))))

    # ---- project_out: 1x1 conv == matmul over channels ----
    out = jnp.dot(wpo_ref[...], g,
                  preferred_element_type=jnp.float32) + bpo_ref[...]  # (C, HW)
    o_ref[0] = out.astype(o_ref.dtype)


def _make_tap_masks(H, W):
    """(9, H*W) float32 table: 1.0 where tap (dy,dx) reads inside the image."""
    hh, ww = np.meshgrid(np.arange(H), np.arange(W), indexing="ij")
    masks = np.zeros((9, H * W), np.float32)
    for k in range(9):
        dy = k // 3 - 1
        dx = k % 3 - 1
        valid = ((hh + dy >= 0) & (hh + dy < H) &
                 (ww + dx >= 0) & (ww + dx < W))
        masks[k] = valid.reshape(-1).astype(np.float32)
    return jnp.asarray(masks)


def feedforward_noca_pallas(x_nchw, params):
    """x_nchw: (N, C, H, W) float32.  Returns (N, C, H, W)."""
    wpi, bpi, wdw, bdw, wpo, bpo = params
    N, C, H, W = x_nchw.shape
    hid = wpi.shape[0]
    HW = H * W

    # Contiguous reshape only — no HBM transpose passes.
    x_flat = x_nchw.reshape(N, C, HW)
    masks = _make_tap_masks(H, W)

    kernel = functools.partial(_ffn_kernel, H=H, W=W)

    out_flat = pl.pallas_call(
        kernel,
        out_shape=jax.ShapeDtypeStruct((N, C, HW), jnp.float32),
        grid_spec=pltpu.PrefetchScalarGridSpec(
            num_scalar_prefetch=0,
            grid=(N,),
            in_specs=[
                pl.BlockSpec((1, C, HW), lambda n: (n, 0, 0)),   # x
                pl.BlockSpec((hid, C), lambda n: (0, 0)),        # wpi
                pl.BlockSpec((hid, 1), lambda n: (0, 0)),        # bpi
                pl.BlockSpec((hid, 9), lambda n: (0, 0)),        # wdw
                pl.BlockSpec((hid, 1), lambda n: (0, 0)),        # bdw
                pl.BlockSpec((C, hid), lambda n: (0, 0)),        # wpo
                pl.BlockSpec((C, 1), lambda n: (0, 0)),          # bpo
                pl.BlockSpec((9, HW), lambda n: (0, 0)),         # tap masks
            ],
            out_specs=pl.BlockSpec((1, C, HW), lambda n: (n, 0, 0)),
        ),
        compiler_params=pltpu.CompilerParams(
            dimension_semantics=("parallel",)),
    )(x_flat, wpi, bpi, wdw, bdw, wpo, bpo, masks)

    return out_flat.reshape(N, C, H, W)


def feedforward_noca_ref(x_nchw, params):
    """Pure-JAX reference (same math, no Pallas), NCHW throughout."""
    wpi, bpi, wdw, bdw, wpo, bpo = params
    N, C, H, W = x_nchw.shape
    hid = wpi.shape[0]
    t = jnp.einsum('fc,nchw->nfhw', wpi, x_nchw) + bpi.reshape(1, hid, 1, 1)
    tp = jnp.pad(t, ((0, 0), (0, 0), (1, 1), (1, 1)))
    w3 = wdw.reshape(hid, 3, 3)
    acc = jnp.zeros_like(t)
    for ky in range(3):
        for kx in range(3):
            acc = acc + tp[:, :, ky:ky + H, kx:kx + W] * w3[:, ky, kx].reshape(1, hid, 1, 1)
    acc = acc + bdw.reshape(1, hid, 1, 1)
    g = 0.5 * acc * (1.0 + jax.lax.erf(acc * (1.0 / math.sqrt(2.0))))
    out = jnp.einsum('cf,nfhw->nchw', wpo, g) + bpo.reshape(1, C, 1, 1)
    return out


def init_params(key, dim, ffn_expansion_factor):
    hidden = int(dim * ffn_expansion_factor)
    ks = jax.random.split(key, 6)
    # project_in: PyTorch weight (hidden, dim, 1, 1) -> stored as (hidden, dim)
    wpi = jax.random.normal(ks[0], (hidden, dim), jnp.float32) * 0.1
    bpi = jax.random.normal(ks[1], (hidden, 1), jnp.float32) * 0.1
    # dwconv: PyTorch weight (hidden, 1, 3, 3) -> stored as (hidden, 9)
    wdw = jax.random.normal(ks[2], (hidden, 9), jnp.float32) * 0.1
    bdw = jax.random.normal(ks[3], (hidden, 1), jnp.float32) * 0.1
    # project_out: PyTorch weight (dim, hidden, 1, 1) -> stored as (dim, hidden)
    wpo = jax.random.normal(ks[4], (dim, hidden), jnp.float32) * 0.1
    bpo = jax.random.normal(ks[5], (dim, 1), jnp.float32) * 0.1
    return (wpi, bpi, wdw, bdw, wpo, bpo)


if __name__ == "__main__":
    key = jax.random.PRNGKey(0)
    k_x, k_p = jax.random.split(key)

    N, dim, H, W = 2, 4, 16, 16
    ffn_expansion_factor = 2.0          # hidden = 8
    bias = True                          # module configured with bias=True

    x = jax.random.normal(k_x, (N, dim, H, W), jnp.float32)
    params = init_params(k_p, dim, ffn_expansion_factor)

    out = feedforward_noca_pallas(x, params)
    out = jax.block_until_ready(out)

    ref = feedforward_noca_ref(x, params)
    assert out.shape == (N, dim, H, W)
    assert jnp.max(jnp.abs(out - ref)) < 1e-4, "mismatch vs reference"

    print("KERNEL_OK")
</pallas_src>

<mosaic_0001>
module attributes {stable_mosaic.version = 11 : i64} {
  func.func @_ffn_kernel(%arg0: i32, %arg1: memref<1x4x256xf32, #tpu.memory_space<vmem>>, %arg2: memref<8x4xf32, #tpu.memory_space<vmem>>, %arg3: memref<8x1xf32, #tpu.memory_space<vmem>>, %arg4: memref<8x9xf32, #tpu.memory_space<vmem>>, %arg5: memref<8x1xf32, #tpu.memory_space<vmem>>, %arg6: memref<4x8xf32, #tpu.memory_space<vmem>>, %arg7: memref<4x1xf32, #tpu.memory_space<vmem>>, %arg8: memref<9x256xf32, #tpu.memory_space<vmem>>, %arg9: memref<1x4x256xf32, #tpu.memory_space<vmem>>) attributes {dimension_semantics = [#tpu.dimension_semantics<parallel>], iteration_bounds = array<i64: 2>, scalar_prefetch = 0 : i64, scratch_operands = 0 : i64, tpu.core_type = #tpu.core_type<tc>, window_params = [{transform_indices = @transform_0, window_bounds = array<i64: 1, 4, 256>}, {pipeline_mode = #tpu.pipeline_mode<synchronous>, transform_indices = @transform_1, window_bounds = array<i64: 8, 4>}, {pipeline_mode = #tpu.pipeline_mode<synchronous>, transform_indices = @transform_2, window_bounds = array<i64: 8, 1>}, {pipeline_mode = #tpu.pipeline_mode<synchronous>, transform_indices = @transform_3, window_bounds = array<i64: 8, 9>}, {pipeline_mode = #tpu.pipeline_mode<synchronous>, transform_indices = @transform_4, window_bounds = array<i64: 8, 1>}, {pipeline_mode = #tpu.pipeline_mode<synchronous>, transform_indices = @transform_5, window_bounds = array<i64: 4, 8>}, {pipeline_mode = #tpu.pipeline_mode<synchronous>, transform_indices = @transform_6, window_bounds = array<i64: 4, 1>}, {pipeline_mode = #tpu.pipeline_mode<synchronous>, transform_indices = @transform_7, window_bounds = array<i64: 9, 256>}, {transform_indices = @transform_8, window_bounds = array<i64: 1, 4, 256>}]} {
    %c0 = arith.constant 0 : index
    %c0_0 = arith.constant 0 : index
    %c0_1 = arith.constant 0 : index
    %0 = vector.load %arg1[%c0, %c0_0, %c0_1] : memref<1x4x256xf32, #tpu.memory_space<vmem>>, vector<1x4x256xf32>
    %1 = vector.shape_cast %0 : vector<1x4x256xf32> to vector<4x256xf32>
    %c0_2 = arith.constant 0 : index
    %c0_3 = arith.constant 0 : index
    %2 = vector.load %arg2[%c0_2, %c0_3] : memref<8x4xf32, #tpu.memory_space<vmem>>, vector<8x4xf32>
    %cst = arith.constant dense<0.000000e+00> : vector<8x256xf32>
    %3 = tpu.matmul %2, %1, %cst {dimension_numbers = #tpu.dot_dimension_numbers<[1], [0], [0], [1], [0, 0, 1, 1], [], []>} : vector<8x4xf32>, vector<4x256xf32>, vector<8x256xf32> -> vector<8x256xf32>
    %c0_4 = arith.constant 0 : index
    %c0_5 = arith.constant 0 : index
    %4 = vector.load %arg3[%c0_4, %c0_5] : memref<8x1xf32, #tpu.memory_space<vmem>>, vector<8x1xf32>
    %5 = vector.broadcast %4 : vector<8x1xf32> to vector<8x256xf32>
    %6 = arith.addf %3, %5 : vector<8x256xf32>
    %c0_6 = arith.constant 0 : index
    %c0_7 = arith.constant 0 : index
    %7 = vector.load %arg4[%c0_6, %c0_7] : memref<8x9xf32, #tpu.memory_space<vmem>>, vector<8x9xf32>
    %c0_8 = arith.constant 0 : index
    %c0_9 = arith.constant 0 : index
    %8 = vector.load %arg8[%c0_8, %c0_9] : memref<9x256xf32, #tpu.memory_space<vmem>>, vector<9x256xf32>
    %9 = vector.extract_strided_slice %7 {offsets = [0, 4], sizes = [8, 1], strides = [1, 1]} : vector<8x9xf32> to vector<8x1xf32>
    %10 = vector.broadcast %9 : vector<8x1xf32> to vector<8x256xf32>
    %11 = arith.mulf %6, %10 : vector<8x256xf32>
    %c17_i32 = arith.constant 17 : i32
    %12 = tpu.dynamic_rotate %6 by %c17_i32 dim 1 : vector<8x256xf32>, i32 -> vector<8x256xf32>
    %13 = vector.extract_strided_slice %8 {offsets = [0, 0], sizes = [1, 256], strides = [1, 1]} : vector<9x256xf32> to vector<1x256xf32>
    %14 = vector.broadcast %13 : vector<1x256xf32> to vector<8x256xf32>
    %15 = arith.mulf %12, %14 : vector<8x256xf32>
    %16 = vector.extract_strided_slice %7 {offsets = [0, 0], sizes = [8, 1], strides = [1, 1]} : vector<8x9xf32> to vector<8x1xf32>
    %17 = vector.broadcast %16 : vector<8x1xf32> to vector<8x256xf32>
    %18 = arith.mulf %15, %17 : vector<8x256xf32>
    %19 = arith.addf %11, %18 : vector<8x256xf32>
    %c16_i32 = arith.constant 16 : i32
    %20 = tpu.dynamic_rotate %6 by %c16_i32 dim 1 : vector<8x256xf32>, i32 -> vector<8x256xf32>
    %21 = vector.extract_strided_slice %8 {offsets = [1, 0], sizes = [1, 256], strides = [1, 1]} : vector<9x256xf32> to vector<1x256xf32>
    %22 = vector.broadcast %21 : vector<1x256xf32> to vector<8x256xf32>
    %23 = arith.mulf %20, %22 : vector<8x256xf32>
    %24 = vector.extract_strided_slice %7 {offsets = [0, 1], sizes = [8, 1], strides = [1, 1]} : vector<8x9xf32> to vector<8x1xf32>
    %25 = vector.broadcast %24 : vector<8x1xf32> to vector<8x256xf32>
    %26 = arith.mulf %23, %25 : vector<8x256xf32>
    %27 = arith.addf %19, %26 : vector<8x256xf32>
    %c15_i32 = arith.constant 15 : i32
    %28 = tpu.dynamic_rotate %6 by %c15_i32 dim 1 : vector<8x256xf32>, i32 -> vector<8x256xf32>
    %29 = vector.extract_strided_slice %8 {offsets = [2, 0], sizes = [1, 256], strides = [1, 1]} : vector<9x256xf32> to vector<1x256xf32>
    %30 = vector.broadcast %29 : vector<1x256xf32> to vector<8x256xf32>
    %31 = arith.mulf %28, %30 : vector<8x256xf32>
    %32 = vector.extract_strided_slice %7 {offsets = [0, 2], sizes = [8, 1], strides = [1, 1]} : vector<8x9xf32> to vector<8x1xf32>
    %33 = vector.broadcast %32 : vector<8x1xf32> to vector<8x256xf32>
    %34 = arith.mulf %31, %33 : vector<8x256xf32>
    %35 = arith.addf %27, %34 : vector<8x256xf32>
    %c1_i32 = arith.constant 1 : i32
    %36 = tpu.dynamic_rotate %6 by %c1_i32 dim 1 : vector<8x256xf32>, i32 -> vector<8x256xf32>
    %37 = vector.extract_strided_slice %8 {offsets = [3, 0], sizes = [1, 256], strides = [1, 1]} : vector<9x256xf32> to vector<1x256xf32>
    %38 = vector.broadcast %37 : vector<1x256xf32> to vector<8x256xf32>
    %39 = arith.mulf %36, %38 : vector<8x256xf32>
    %40 = vector.extract_strided_slice %7 {offsets = [0, 3], sizes = [8, 1], strides = [1, 1]} : vector<8x9xf32> to vector<8x1xf32>
    %41 = vector.broadcast %40 : vector<8x1xf32> to vector<8x256xf32>
    %42 = arith.mulf %39, %41 : vector<8x256xf32>
    %43 = arith.addf %35, %42 : vector<8x256xf32>
    %c255_i32 = arith.constant 255 : i32
    %44 = tpu.dynamic_rotate %6 by %c255_i32 dim 1 : vector<8x256xf32>, i32 -> vector<8x256xf32>
    %45 = vector.extract_strided_slice %8 {offsets = [5, 0], sizes = [1, 256], strides = [1, 1]} : vector<9x256xf32> to vector<1x256xf32>
    %46 = vector.broadcast %45 : vector<1x256xf32> to vector<8x256xf32>
    %47 = arith.mulf %44, %46 : vector<8x256xf32>
    %48 = vector.extract_strided_slice %7 {offsets = [0, 5], sizes = [8, 1], strides = [1, 1]} : vector<8x9xf32> to vector<8x1xf32>
    %49 = vector.broadcast %48 : vector<8x1xf32> to vector<8x256xf32>
    %50 = arith.mulf %47, %49 : vector<8x256xf32>
    %51 = arith.addf %43, %50 : vector<8x256xf32>
    %c241_i32 = arith.constant 241 : i32
    %52 = tpu.dynamic_rotate %6 by %c241_i32 dim 1 : vector<8x256xf32>, i32 -> vector<8x256xf32>
    %53 = vector.extract_strided_slice %8 {offsets = [6, 0], sizes = [1, 256], strides = [1, 1]} : vector<9x256xf32> to vector<1x256xf32>
    %54 = vector.broadcast %53 : vector<1x256xf32> to vector<8x256xf32>
    %55 = arith.mulf %52, %54 : vector<8x256xf32>
    %56 = vector.extract_strided_slice %7 {offsets = [0, 6], sizes = [8, 1], strides = [1, 1]} : vector<8x9xf32> to vector<8x1xf32>
    %57 = vector.broadcast %56 : vector<8x1xf32> to vector<8x256xf32>
    %58 = arith.mulf %55, %57 : vector<8x256xf32>
    %59 = arith.addf %51, %58 : vector<8x256xf32>
    %c240_i32 = arith.constant 240 : i32
    %60 = tpu.dynamic_rotate %6 by %c240_i32 dim 1 : vector<8x256xf32>, i32 -> vector<8x256xf32>
    %61 = vector.extract_strided_slice %8 {offsets = [7, 0], sizes = [1, 256], strides = [1, 1]} : vector<9x256xf32> to vector<1x256xf32>
    %62 = vector.broadcast %61 : vector<1x256xf32> to vector<8x256xf32>
    %63 = arith.mulf %60, %62 : vector<8x256xf32>
    %64 = vector.extract_strided_slice %7 {offsets = [0, 7], sizes = [8, 1], strides = [1, 1]} : vector<8x9xf32> to vector<8x1xf32>
    %65 = vector.broadcast %64 : vector<8x1xf32> to vector<8x256xf32>
    %66 = arith.mulf %63, %65 : vector<8x256xf32>
    %67 = arith.addf %59, %66 : vector<8x256xf32>
    %c239_i32 = arith.constant 239 : i32
    %68 = tpu.dynamic_rotate %6 by %c239_i32 dim 1 : vector<8x256xf32>, i32 -> vector<8x256xf32>
    %69 = vector.extract_strided_slice %8 {offsets = [8, 0], sizes = [1, 256], strides = [1, 1]} : vector<9x256xf32> to vector<1x256xf32>
    %70 = vector.broadcast %69 : vector<1x256xf32> to vector<8x256xf32>
    %71 = arith.mulf %68, %70 : vector<8x256xf32>
    %72 = vector.extract_strided_slice %7 {offsets = [0, 8], sizes = [8, 1], strides = [1, 1]} : vector<8x9xf32> to vector<8x1xf32>
    %73 = vector.broadcast %72 : vector<8x1xf32> to vector<8x256xf32>
    %74 = arith.mulf %71, %73 : vector<8x256xf32>
    %75 = arith.addf %67, %74 : vector<8x256xf32>
    %c0_10 = arith.constant 0 : index
    %c0_11 = arith.constant 0 : index
    %76 = vector.load %arg5[%c0_10, %c0_11] : memref<8x1xf32, #tpu.memory_space<vmem>>, vector<8x1xf32>
    %77 = vector.broadcast %76 : vector<8x1xf32> to vector<8x256xf32>
    %78 = arith.addf %75, %77 : vector<8x256xf32>
    %cst_12 = arith.constant 5.000000e-01 : f32
    %79 = vector.broadcast %cst_12 : f32 to vector<8x256xf32>
    %80 = arith.mulf %79, %78 : vector<8x256xf32>
    %cst_13 = arith.constant 0.707106769 : f32
    %81 = vector.broadcast %cst_13 : f32 to vector<8x256xf32>
    %82 = arith.mulf %78, %81 : vector<8x256xf32>
    %83 = math.erf %82 : vector<8x256xf32>
    %cst_14 = arith.constant 1.000000e+00 : f32
    %84 = vector.broadcast %cst_14 : f32 to vector<8x256xf32>
    %85 = arith.addf %84, %83 : vector<8x256xf32>
    %86 = arith.mulf %80, %85 : vector<8x256xf32>
    %c0_15 = arith.constant 0 : index
    %c0_16 = arith.constant 0 : index
    %87 = vector.load %arg6[%c0_15, %c0_16] : memref<4x8xf32, #tpu.memory_space<vmem>>, vector<4x8xf32>
    %cst_17 = arith.constant dense<0.000000e+00> : vector<4x256xf32>
    %88 = tpu.matmul %87, %86, %cst_17 {dimension_numbers = #tpu.dot_dimension_numbers<[1], [0], [0], [1], [0, 0, 1, 1], [], []>} : vector<4x8xf32>, vector<8x256xf32>, vector<4x256xf32> -> vector<4x256xf32>
    %c0_18 = arith.constant 0 : index
    %c0_19 = arith.constant 0 : index
    %89 = vector.load %arg7[%c0_18, %c0_19] : memref<4x1xf32, #tpu.memory_space<vmem>>, vector<4x1xf32>
    %90 = vector.broadcast %89 : vector<4x1xf32> to vector<4x256xf32>
    %91 = arith.addf %88, %90 : vector<4x256xf32>
    %c0_20 = arith.constant 0 : index
    %c0_21 = arith.constant 0 : index
    %c0_22 = arith.constant 0 : index
    %92 = vector.load %arg9[%c0_20, %c0_21, %c0_22] : memref<1x4x256xf32, #tpu.memory_space<vmem>>, vector<1x4x256xf32>
    %93 = vector.shape_cast %92 : vector<1x4x256xf32> to vector<4x256xf32>
    %94 = vector.shape_cast %91 : vector<4x256xf32> to vector<1x4x256xf32>
    tpu.vector_store %arg9[%c0_20, %c0_21, %c0_22], %94 {strides = array<i32>} : memref<1x4x256xf32, #tpu.memory_space<vmem>>, vector<1x4x256xf32>,
    return
  }
  func.func @transform_0(%arg0: i32) -> (i32, i32, i32) {
    %c0_i32 = arith.constant 0 : i32
    %c0_i32_0 = arith.constant 0 : i32
    %c0_i32_1 = arith.constant 0 : i32
    return %arg0, %c0_i32, %c0_i32_0 : i32, i32, i32
  }
  func.func @transform_1(%arg0: i32) -> (i32, i32) {
    %c0_i32 = arith.constant 0 : i32
    %c0_i32_0 = arith.constant 0 : i32
    %c0_i32_1 = arith.constant 0 : i32
    return %c0_i32, %c0_i32_0 : i32, i32
  }
  func.func @transform_2(%arg0: i32) -> (i32, i32) {
    %c0_i32 = arith.constant 0 : i32
    %c0_i32_0 = arith.constant 0 : i32
    %c0_i32_1 = arith.constant 0 : i32
    return %c0_i32, %c0_i32_0 : i32, i32
  }
  func.func @transform_3(%arg0: i32) -> (i32, i32) {
    %c0_i32 = arith.constant 0 : i32
    %c0_i32_0 = arith.constant 0 : i32
    %c0_i32_1 = arith.constant 0 : i32
    return %c0_i32, %c0_i32_0 : i32, i32
  }
  func.func @transform_4(%arg0: i32) -> (i32, i32) {
    %c0_i32 = arith.constant 0 : i32
    %c0_i32_0 = arith.constant 0 : i32
    %c0_i32_1 = arith.constant 0 : i32
    return %c0_i32, %c0_i32_0 : i32, i32
  }
  func.func @transform_5(%arg0: i32) -> (i32, i32) {
    %c0_i32 = arith.constant 0 : i32
    %c0_i32_0 = arith.constant 0 : i32
    %c0_i32_1 = arith.constant 0 : i32
    return %c0_i32, %c0_i32_0 : i32, i32
  }
  func.func @transform_6(%arg0: i32) -> (i32, i32) {
    %c0_i32 = arith.constant 0 : i32
    %c0_i32_0 = arith.constant 0 : i32
    %c0_i32_1 = arith.constant 0 : i32
    return %c0_i32, %c0_i32_0 : i32, i32
  }
  func.func @transform_7(%arg0: i32) -> (i32, i32) {
    %c0_i32 = arith.constant 0 : i32
    %c0_i32_0 = arith.constant 0 : i32
    %c0_i32_1 = arith.constant 0 : i32
    return %c0_i32, %c0_i32_0 : i32, i32
  }
  func.func @transform_8(%arg0: i32) -> (i32, i32, i32) {
    %c0_i32 = arith.constant 0 : i32
    %c0_i32_0 = arith.constant 0 : i32
    %c0_i32_1 = arith.constant 0 : i32
    return %arg0, %c0_i32, %c0_i32_0 : i32, i32, i32
  }
}

</mosaic_0001>

<llo_original>
// kernel: tpu_custom_call.1
$region0: #{tpu_custom_call.1}
  #allocation0 [shape = 'u32[]', space=smem, size = 0x4, offset = 0x4, fixed_abs, tag = 'smem constant byte address 0x4 - core index']
  #allocation1 [shape = 'u32[144,128]{1,0:T(1,128)}', space=vmem, size = 0x12000, scoped, tag = 'internal scratch']
  %s0 = inlined_call_operand.vmem [shape: f32[2,4,256], index: 0, kind: input, shape index: {}]
  %s1 = inlined_call_operand.vmem [shape: f32[8,4], index: 1, kind: input, shape index: {}]
  %s2 = inlined_call_operand.vmem [shape: f32[8,1], index: 2, kind: input, shape index: {}]
  %s3 = inlined_call_operand.vmem [shape: f32[8,9], index: 3, kind: input, shape index: {}]
  %s4 = inlined_call_operand.vmem [shape: f32[8,1], index: 4, kind: input, shape index: {}]
  %s5 = inlined_call_operand.vmem [shape: f32[4,8], index: 5, kind: input, shape index: {}]
  %s6 = inlined_call_operand.vmem [shape: f32[4,1], index: 6, kind: input, shape index: {}]
  %s7 = inlined_call_operand.vmem [shape: f32[9,256], index: 7, kind: input, shape index: {}]
  %s8 = inlined_call_operand.hbm [shape: f32[2,4,256], index: 8, kind: output, shape index: {}]
  %s9 = sld [smem:[#allocation0]]
  $region65: #{tpu_custom_call.1} parent=0
    _
  %s11 = ssub.s32 1, %s9
  %s12 = scalar_select 0, %s11, %s9
  $region1: #{tpu_custom_call.1} parent=0
    #allocation2 [shape = 'u8[8192]{0}', space=vmem, size = 0x2000, scoped, tag = 'output window, operand 0']
    #allocation3 [shape = 's32[2]{0}', space=sflag, size = 0x8, scoped, tag = 'scoped memory for tpu_custom_call.1']
    %13 = vsyncpa [#allocation3], 0
    %s14 = scalar_lea.sflag [#allocation3], 1
    %15 = vsyncpa %s14, 0
    loop: start=0, step=1, limit=4
    $region2: #{tpu_custom_call.1} parent=1 // loop_pre_header
      _
    $region3: #{tpu_custom_call.1} parent=1 // loop_header
      %s17 = sphi 0, %s21
      %p18 = scmp.ge.s32.totalorder %s17, 4
      %s27 = sphi 0, %s29
      %s30 = sphi 0, %s27
      %s31 = sphi 0, %s30
      %s47 = sphi 0, %s31
      %s51 = sphi 0, %s51
      %s53 = sphi 0, %s51
      %s54 = sphi 0, %s53
      %s68 = sphi 0, %s54
      %s72 = sphi 0, %s72
      %s74 = sphi 0, %s72
      %s75 = sphi 0, %s74
      %s89 = sphi 0, %s75
      %s93 = sphi 0, %s93
      %s95 = sphi 0, %s93
      %s96 = sphi 0, %s95
      %s110 = sphi 0, %s96
      %s114 = sphi 0, %s114
      %s116 = sphi 0, %s114
      %s117 = sphi 0, %s116
      %s131 = sphi 0, %s117
      %s135 = sphi 0, %s135
      %s137 = sphi 0, %s135
      %s138 = sphi 0, %s137
      %s152 = sphi 0, %s138
      %s156 = sphi 0, %s156
      %s158 = sphi 0, %s156
      %s159 = sphi 0, %s158
      %s173 = sphi 0, %s159
      %s177 = sphi 0, %s177
      %s179 = sphi 0, %s177
      %s180 = sphi 0, %s179
      %s194 = sphi 0, %s180
      %s200 = sphi 0, %s202
      %s203 = sphi 0, %s200
      %s204 = sphi 0, %s203
      %s220 = sphi 0, %s204
    $region4: #{tpu_custom_call.1} parent=1 // loop_header_branch
      %20 = sbr.rel (%p18) target = $region8
    $region5: #{tpu_custom_call.1} parent=1 // loop_body
      %s22 = ssub.s32 %s17, 1
      %s23 = ssub.s32 %s17, 2
      %s24 = sadd.s32 %s17, 1
      %s25 = ssub.s32 %s17, %s24
      %p26 = scmp.eq.s32.totalorder %s25, 0
      %s28 = sadd.s32 %s27, 1
      %s29 = scalar_select %p26, %s27, %s28
      %p32 = pneg %p26
      %p33 = scmp.eq.s32.totalorder %s17, 1
      %p34 = por %p32, %p33
      %p35 = scmp.ne.s32.totalorder %s27, %s30
      %p36 = scmp.eq.s32.totalorder %s17, 0
      %p37 = por %p35, %p36
      %p38 = scmp.ne.s32.totalorder %s27, %s30
      %p39 = scmp.eq.s32.totalorder %s22, 1
      %p40 = por %p38, %p39
      %p41 = scmp.ne.s32.totalorder %s30, %s31
      %p42 = scmp.eq.s32.totalorder %s22, 0
      %p43 = por %p41, %p42
      %p44 = scmp.ne.s32.totalorder %s30, %s31
      %p45 = scmp.eq.s32.totalorder %s23, 1
      %p46 = por %p44, %p45
      %p48 = scmp.ne.s32.totalorder %s31, %s47
      %p49 = scmp.eq.s32.totalorder %s23, 0
      %p50 = por %p48, %p49
      %s52 = sadd.s32 %s51, 1
      %p55 = scmp.eq.s32.totalorder %s17, 1
      %p56 = scmp.ne.s32.totalorder %s51, %s53
      %p57 = scmp.eq.s32.totalorder %s17, 0
      %p58 = por %p56, %p57
      %p59 = scmp.ne.s32.totalorder %s51, %s53
      %p60 = scmp.eq.s32.totalorder %s22, 1
      %p61 = por %p59, %p60
      %p62 = scmp.ne.s32.totalorder %s53, %s54
      %p63 = scmp.eq.s32.totalorder %s22, 0
      %p64 = por %p62, %p63
      %p65 = scmp.ne.s32.totalorder %s53, %s54
      %p66 = scmp.eq.s32.totalorder %s23, 1
      %p67 = por %p65, %p66
      %p69 = scmp.ne.s32.totalorder %s54, %s68
      %p70 = scmp.eq.s32.totalorder %s23, 0
      %p71 = por %p69, %p70
      %s73 = sadd.s32 %s72, 1
      %p76 = scmp.eq.s32.totalorder %s17, 1
      %p77 = scmp.ne.s32.totalorder %s72, %s74
      %p78 = scmp.eq.s32.totalorder %s17, 0
      %p79 = por %p77, %p78
      %p80 = scmp.ne.s32.totalorder %s72, %s74
      %p81 = scmp.eq.s32.totalorder %s22, 1
      %p82 = por %p80, %p81
      %p83 = scmp.ne.s32.totalorder %s74, %s75
      %p84 = scmp.eq.s32.totalorder %s22, 0
      %p85 = por %p83, %p84
      %p86 = scmp.ne.s32.totalorder %s74, %s75
      %p87 = scmp.eq.s32.totalorder %s23, 1
      %p88 = por %p86, %p87
      %p90 = scmp.ne.s32.totalorder %s75, %s89
      %p91 = scmp.eq.s32.totalorder %s23, 0
      %p92 = por %p90, %p91
      %s94 = sadd.s32 %s93, 1
      %p97 = scmp.eq.s32.totalorder %s17, 1
      %p98 = scmp.ne.s32.totalorder %s93, %s95
      %p99 = scmp.eq.s32.totalorder %s17, 0
      %p100 = por %p98, %p99
      %p101 = scmp.ne.s32.totalorder %s93, %s95
      %p102 = scmp.eq.s32.totalorder %s22, 1
      %p103 = por %p101, %p102
      %p104 = scmp.ne.s32.totalorder %s95, %s96
      %p105 = scmp.eq.s32.totalorder %s22, 0
      %p106 = por %p104, %p105
      %p107 = scmp.ne.s32.totalorder %s95, %s96
      %p108 = scmp.eq.s32.totalorder %s23, 1
      %p109 = por %p107, %p108
      %p111 = scmp.ne.s32.totalorder %s96, %s110
      %p112 = scmp.eq.s32.totalorder %s23, 0
      %p113 = por %p111, %p112
      %s115 = sadd.s32 %s114, 1
      %p118 = scmp.eq.s32.totalorder %s17, 1
      %p119 = scmp.ne.s32.totalorder %s114, %s116
      %p120 = scmp.eq.s32.totalorder %s17, 0
      %p121 = por %p119, %p120
      %p122 = scmp.ne.s32.totalorder %s114, %s116
      %p123 = scmp.eq.s32.totalorder %s22, 1
      %p124 = por %p122, %p123
      %p125 = scmp.ne.s32.totalorder %s116, %s117
      %p126 = scmp.eq.s32.totalorder %s22, 0
      %p127 = por %p125, %p126
      %p128 = scmp.ne.s32.totalorder %s116, %s117
      %p129 = scmp.eq.s32.totalorder %s23, 1
      %p130 = por %p128, %p129
      %p132 = scmp.ne.s32.totalorder %s117, %s131
      %p133 = scmp.eq.s32.totalorder %s23, 0
      %p134 = por %p132, %p133
      %s136 = sadd.s32 %s135, 1
      %p139 = scmp.eq.s32.totalorder %s17, 1
      %p140 = scmp.ne.s32.totalorder %s135, %s137
      %p141 = scmp.eq.s32.totalorder %s17, 0
      %p142 = por %p140, %p141
      %p143 = scmp.ne.s32.totalorder %s135, %s137
      %p144 = scmp.eq.s32.totalorder %s22, 1
      %p145 = por %p143, %p144
      %p146 = scmp.ne.s32.totalorder %s137, %s138
      %p147 = scmp.eq.s32.totalorder %s22, 0
      %p148 = por %p146, %p147
      %p149 = scmp.ne.s32.totalorder %s137, %s138
      %p150 = scmp.eq.s32.totalorder %s23, 1
      %p151 = por %p149, %p150
      %p153 = scmp.ne.s32.totalorder %s138, %s152
      %p154 = scmp.eq.s32.totalorder %s23, 0
      %p155 = por %p153, %p154
      %s157 = sadd.s32 %s156, 1
      %p160 = scmp.eq.s32.totalorder %s17, 1
      %p161 = scmp.ne.s32.totalorder %s156, %s158
      %p162 = scmp.eq.s32.totalorder %s17, 0
      %p163 = por %p161, %p162
      %p164 = scmp.ne.s32.totalorder %s156, %s158
      %p165 = scmp.eq.s32.totalorder %s22, 1
      %p166 = por %p164, %p165
      %p167 = scmp.ne.s32.totalorder %s158, %s159
      %p168 = scmp.eq.s32.totalorder %s22, 0
      %p169 = por %p167, %p168
      %p170 = scmp.ne.s32.totalorder %s158, %s159
      %p171 = scmp.eq.s32.totalorder %s23, 1
      %p172 = por %p170, %p171
      %p174 = scmp.ne.s32.totalorder %s159, %s173
      %p175 = scmp.eq.s32.totalorder %s23, 0
      %p176 = por %p174, %p175
      %s178 = sadd.s32 %s177, 1
      %p181 = scmp.eq.s32.totalorder %s17, 1
      %p182 = scmp.ne.s32.totalorder %s177, %s179
      %p183 = scmp.eq.s32.totalorder %s17, 0
      %p184 = por %p182, %p183
      %p185 = scmp.ne.s32.totalorder %s177, %s179
      %p186 = scmp.eq.s32.totalorder %s22, 1
      %p187 = por %p185, %p186
      %p188 = scmp.ne.s32.totalorder %s179, %s180
      %p189 = scmp.eq.s32.totalorder %s22, 0
      %p190 = por %p188, %p189
      %p191 = scmp.ne.s32.totalorder %s179, %s180
      %p192 = scmp.eq.s32.totalorder %s23, 1
      %p193 = por %p191, %p192
      %p195 = scmp.ne.s32.totalorder %s180, %s194
      %p196 = scmp.eq.s32.totalorder %s23, 0
      %p197 = por %p195, %p196
      %s198 = ssub.s32 %s17, %s24
      %p199 = scmp.eq.s32.totalorder %s198, 0
      %s201 = sadd.s32 %s200, 1
      %s202 = scalar_select %p199, %s200, %s201
      %p205 = pneg %p199
      %p206 = scmp.eq.s32.totalorder %s17, 1
      %p207 = por %p205, %p206
      %p208 = scmp.ne.s32.totalorder %s200, %s203
      %p209 = scmp.eq.s32.totalorder %s17, 0
      %p210 = por %p208, %p209
      %p211 = scmp.ne.s32.totalorder %s200, %s203
      %p212 = scmp.eq.s32.totalorder %s22, 1
      %p213 = por %p211, %p212
      %p214 = scmp.ne.s32.totalorder %s203, %s204
      %p215 = scmp.eq.s32.totalorder %s22, 0
      %p216 = por %p214, %p215
      %p217 = scmp.ne.s32.totalorder %s203, %s204
      %p218 = scmp.eq.s32.totalorder %s23, 1
      %p219 = por %p217, %p218
      %p221 = scmp.ne.s32.totalorder %s204, %s220
      %p222 = scmp.eq.s32.totalorder %s23, 0
      %p223 = por %p221, %p222
      %p224 = scmp.le.s32.totalorder 1, %s17
      %p225 = scmp.lt.s32.totalorder %s17, 3
      %p226 = pnand %p224, %p225
      %p227 = pneg %p226
      // Predicated region
      $region9: #{tpu_custom_call.1} parent=5 // pred_check
        _
      $region10: #{tpu_custom_call.1} parent=5 // pred_check_branch
        %229 = sbr.rel (%p226) target = $region12
      $region11: #{tpu_custom_call.1} parent=5 // pred_region
        %s230 = ssub.s32 %s17, 1
        // Predicated region
        $region13: #{tpu_custom_call.1} parent=11 // pred_check
          %p231 = pneg %p64
        $region14: #{tpu_custom_call.1} parent=11 // pred_check_branch
          %233 = sbr.rel (%p231) target = $region16
        $region15: #{tpu_custom_call.1} parent=11 // pred_region
          _
        $region16: #{tpu_custom_call.1} parent=11 // pred_fallthru
          _
        // Predicated region
        $region17: #{tpu_custom_call.1} parent=11 // pred_check
          %p234 = pneg %p85
        $region18: #{tpu_custom_call.1} parent=11 // pred_check_branch
          %236 = sbr.rel (%p234) target = $region20
        $region19: #{tpu_custom_call.1} parent=11 // pred_region
          _
        $region20: #{tpu_custom_call.1} parent=11 // pred_fallthru
          _
        // Predicated region
        $region21: #{tpu_custom_call.1} parent=11 // pred_check
          %p237 = pneg %p106
        $region22: #{tpu_custom_call.1} parent=11 // pred_check_branch
          %239 = sbr.rel (%p237) target = $region24
        $region23: #{tpu_custom_call.1} parent=11 // pred_region
          _
        $region24: #{tpu_custom_call.1} parent=11 // pred_fallthru
          _
        // Predicated region
        $region25: #{tpu_custom_call.1} parent=11 // pred_check
          %p240 = pneg %p127
        $region26: #{tpu_custom_call.1} parent=11 // pred_check_branch
          %242 = sbr.rel (%p240) target = $region28
        $region27: #{tpu_custom_call.1} parent=11 // pred_region
          _
        $region28: #{tpu_custom_call.1} parent=11 // pred_fallthru
          _
        // Predicated region
        $region29: #{tpu_custom_call.1} parent=11 // pred_check
          %p243 = pneg %p148
        $region30: #{tpu_custom_call.1} parent=11 // pred_check_branch
          %245 = sbr.rel (%p243) target = $region32
        $region31: #{tpu_custom_call.1} parent=11 // pred_region
          _
        $region32: #{tpu_custom_call.1} parent=11 // pred_fallthru
          _
        // Predicated region
        $region33: #{tpu_custom_call.1} parent=11 // pred_check
          %p246 = pneg %p169
        $region34: #{tpu_custom_call.1} parent=11 // pred_check_branch
          %248 = sbr.rel (%p246) target = $region36
        $region35: #{tpu_custom_call.1} parent=11 // pred_region
          _
        $region36: #{tpu_custom_call.1} parent=11 // pred_fallthru
          _
        // Predicated region
        $region37: #{tpu_custom_call.1} parent=11 // pred_check
          %p249 = pneg %p190
        $region38: #{tpu_custom_call.1} parent=11 // pred_check_branch
          %251 = sbr.rel (%p249) target = $region40
        $region39: #{tpu_custom_call.1} parent=11 // pred_region
          _
        $region40: #{tpu_custom_call.1} parent=11 // pred_fallthru
          _
      $region12: #{tpu_custom_call.1} parent=5 // pred_fallthru
        _
      %p252 = scmp.lt.s32.totalorder %s17, 2
      // Predicated region
      $region41: #{tpu_custom_call.1} parent=5 // pred_check
        %p253 = pneg %p252
      $region42: #{tpu_custom_call.1} parent=5 // pred_check_branch
        %255 = sbr.rel (%p253) target = $region44
      $region43: #{tpu_custom_call.1} parent=5 // pred_region
        // Predicated region
        $region45: #{tpu_custom_call.1} parent=43 // pred_check
          %p256 = pneg %p37
        $region46: #{tpu_custom_call.1} parent=43 // pred_check_branch
          %258 = sbr.rel (%p256) target = $region48
        $region47: #{tpu_custom_call.1} parent=43 // pred_region
          %p259 = scmp.lt.s32.totalorder %s17, 1
          %s260 = scalar_select %p259, %s17, 1
          %s261 = smul.addr %s260, 2
          %s262 = smul.addr %s261, 4
          %s263 = scalar_lea.vmem %s0, %s262
        $region48: #{tpu_custom_call.1} parent=43 // pred_fallthru
          _
      $region44: #{tpu_custom_call.1} parent=5 // pred_fallthru
        _
      %p264 = scmp.le.s32.totalorder 1, %s17
      %p265 = scmp.lt.s32.totalorder %s17, 3
      %p266 = pnand %p264, %p265
      %p267 = pneg %p266
      // Predicated region
      $region49: #{tpu_custom_call.1} parent=5 // pred_check
        _
      $region50: #{tpu_custom_call.1} parent=5 // pred_check_branch
        %269 = sbr.rel (%p266) target = $region52
      $region51: #{tpu_custom_call.1} parent=5 // pred_region
        %s270 = ssub.s32 %s17, 1
        %p271 = scmp.lt.s32.totalorder %s22, 1
        %s272 = scalar_select %p271, %s22, 1
        %s273 = smul.addr %s272, 2
        %s274 = smul.addr %s273, 4
        %s275 = scalar_lea.vmem %s0, %s274
        %p276 = pneg %p43
        %p277 = pneg %p40
        %p278 = pneg %p64
        %p279 = pneg %p61
        %p280 = pneg %p85
        %p281 = pneg %p82
        %p282 = pneg %p106
        %p283 = pneg %p103
        %p284 = pneg %p127
        %p285 = pneg %p124
        %p286 = pneg %p148
        %p287 = pneg %p145
        %p288 = pneg %p169
        %p289 = pneg %p166
        %p290 = pneg %p190
        %p291 = pneg %p187
        %p292 = pneg %p216
        %p293 = pneg %p213
        %s294 = sand.u32 %s203, 1
        %s295 = scalar_lea.sflag [#allocation3], %s294
        %s296 = sand.u32 %s203, 1
        %s297 = smul.addr %s296, 8
        %s298 = scalar_lea.vmem [#allocation2], %s297
        %p299 = scmp.lt.s32.totalorder %s22, 1
        %s300 = scalar_select %p299, %s22, 1
        %s301 = smul.addr %s300, 2
        %s302 = smul.addr %s301, 4
        %s303 = scalar_lea.vmem %s0, %s302
        %v304 = vld [vmem:[%s303] sm:$0xff]
        %v305 = vld [vmem:[%s1] sm:$0xff]
        %v306 = vld [vmem:[%s2] sm:$0xff]
        %308 = vset.pattern.permute.xlu0 0
        %309 = vperm.xlu0 %308, %v306
        %v310 = vpop.permute.xlu0 %309
        %v313 = vcombine.high %v304, %v304
        %vm314 = vcmask 31744
        %v316 = vsel %vm314, %v305, 0
        %vm318 = vcmask 1043456
        %v319 = vsel %vm318, %v304, 0
        %v321 = vsel %vm318, %v313, 0
        %323 = vmatprep.subr.mxu0 %v321
        %324 = vmatpush1.msra.mxu0 %v319
        %325 = vmatprep.subr.mxu0 0.0
        %326 = vmatpush1.msra.mxu0 0.0
        %327 = vmatprep.subr.mxu0 0.0
        %328 = vmatpush1.msra.mxu0 0.0
        %329 = vmatprep.subr.mxu0 0.0
        %330 = vmatpush1.msra.mxu0 0.0
        %331 = vmatprep.subr.mxu0 0.0
        %332 = vmatpush1.msra.mxu0 0.0
        %333 = vmatprep.subr.mxu0 0.0
        %334 = vmatpush1.msra.mxu0 0.0
        %335 = vmatprep.subr.mxu0 0.0
        %336 = vmatpush1.msra.mxu0 0.0
        %337 = vmatprep.subr.mxu0 0.0
        %338 = vmatpush1.msra.mxu0 0.0
        %339 = vmatprep.subr.mxu0 0.0
        %340 = vmatpush1.msra.mxu0 0.0
        %341 = vmatprep.subr.mxu0 0.0
        %342 = vmatpush1.msra.mxu0 0.0
        %343 = vmatprep.subr.mxu0 0.0
        %344 = vmatpush1.msra.mxu0 0.0
        %345 = vmatprep.subr.mxu0 0.0
        %346 = vmatpush1.msra.mxu0 0.0
        %347 = vmatprep.subr.mxu0 0.0
        %348 = vmatpush1.msra.mxu0 0.0
        %349 = vmatprep.subr.mxu0 0.0
        %350 = vmatpush1.msra.mxu0 0.0
        %351 = vmatprep.subr.mxu0 0.0
        %352 = vmatpush1.msra.mxu0 0.0
        %353 = vmatprep.subr.mxu0 0.0
        %354 = vmatpush1.msra.mxu0 0.0
        %355 = vmatprep.subr.mxu0 0.0
        %356 = vmatpush1.msra.mxu0 0.0
        %357 = vmatprep.subr.mxu0 0.0
        %358 = vmatpush1.msra.mxu0 0.0
        %359 = vmatprep.subr.mxu0 0.0
        %360 = vmatpush1.msra.mxu0 0.0
        %361 = vmatprep.subr.mxu0 0.0
        %362 = vmatpush1.msra.mxu0 0.0
        %363 = vmatprep.subr.mxu0 0.0
        %364 = vmatpush1.msra.mxu0 0.0
        %365 = vmatprep.subr.mxu0 0.0
        %366 = vmatpush1.msra.mxu0 0.0
        %367 = vmatprep.subr.mxu0 0.0
        %368 = vmatpush1.msra.mxu0 0.0
        %369 = vmatprep.subr.mxu0 0.0
        %370 = vmatpush1.msra.mxu0 0.0
        %371 = vmatprep.subr.mxu0 0.0
        %372 = vmatpush1.msra.mxu0 0.0
        %373 = vmatprep.subr.mxu0 0.0
        %374 = vmatpush1.msra.mxu0 0.0
        %375 = vmatprep.subr.mxu0 0.0
        %376 = vmatpush1.msra.mxu0 0.0
        %377 = vmatprep.subr.mxu0 0.0
        %378 = vmatpush1.msra.mxu0 0.0
        %379 = vmatprep.subr.mxu0 0.0
        %380 = vmatpush1.msra.mxu0 0.0
        %381 = vmatprep.subr.mxu0 0.0
        %382 = vmatpush1.msra.mxu0 0.0
        %383 = vmatprep.subr.mxu0 0.0
        %384 = vmatpush1.msra.mxu0 0.0
        %385 = vmatprep.subr.mxu0 0.0
        %386 = vmatpush1.msra.mxu0 0.0
        %387 = vmatprep.mubr.f32.mxu0 0.0
        %388 = vmatmul.mubr.f32.gmra.mrb[0].mxu0 %v316
        %v389 = vpop.f32.mrb[0].mxu0
        %v390 = vadd.f32 %v310, %v389
        %v391 = vpop.f32.mrb[0].mxu0
        %v392 = vadd.f32 %v310, %v391
        %393 = vdwg.mxu0
        %v394 = vld [vmem:[%s3] sm:$0xff]
        %v395 = vld [vmem:[%s7] sm:$0xff]
        %v396 = vld [vmem:[%s7 + $0x8] sm:$0xff]
        %v397 = vld [vmem:[%s7 + $0x10] sm:$0x1]
        %v398 = vld [vmem:[%s7 + $0x18] sm:$0x1]
        %400 = vset.pattern.permute.xlu0 4
        %401 = vperm.xlu0 %400, %v394
        %v402 = vpop.permute.xlu0 %401
        %v404 = vmul.f32 %v390, %v402
        %v405 = vmul.f32 %v392, %v402
        %406 = vrot.lane.b32.xlu0 %v390, 17
        %v407 = vpop.permute.xlu0 %406
        %408 = vrot.lane.b32.xlu0 %v392, 17
        %v409 = vpop.permute.xlu0 %408
        %v410 = vlaneseq
        %v411 = vand.u32 %v410, 127
        %vm412 = vcmp.lt.s32.totalorder %v411, 17
        %v413 = vsel %vm412, %v407, %v409
        %v414 = vsel %vm412, %v409, %v407
        %v415 = vlaneseq
        %v416 = vshrl.u32 %v415, 7
        %v417 = vsub.s32 0, %v416
        %v418 = vrot.slane %v395, %v417
        %v419 = vlaneseq
        %v420 = vshrl.u32 %v419, 7
        %v421 = vsub.s32 0, %v420
        %v422 = vrot.slane %v396, %v421
        %v423 = vmul.f32 %v414, %v418
        %v424 = vmul.f32 %v413, %v422
        %425 = vset.pattern.permute.xlu0 0
        %426 = vperm.xlu0 %425, %v394
        %v427 = vpop.permute.xlu0 %426
        %v429 = vmul.f32 %v423, %v427
        %v430 = vmul.f32 %v424, %v427
        %v431 = vadd.f32 %v404, %v429
        %v432 = vadd.f32 %v405, %v430
        %433 = vrot.lane.b32.xlu0 %v390, 16
        %v434 = vpop.permute.xlu0 %433
        %435 = vrot.lane.b32.xlu0 %v392, 16
        %v436 = vpop.permute.xlu0 %435
        %vm437 = vcmp.lt.s32.totalorder %v411, 16
        %v438 = vsel %vm437, %v434, %v436
        %v439 = vsel %vm437, %v436, %v434
        %v440 = vlaneseq
        %v441 = vshrl.u32 %v440, 7
        %v442 = vsub.s32 1, %v441
        %v443 = vrot.slane %v395, %v442
        %v444 = vlaneseq
        %v445 = vshrl.u32 %v444, 7
        %v446 = vsub.s32 1, %v445
        %v447 = vrot.slane %v396, %v446
        %v448 = vmul.f32 %v439, %v443
        %v449 = vmul.f32 %v438, %v447
        %450 = vset.pattern.permute.xlu0 1
        %451 = vperm.xlu0 %450, %v394
        %v452 = vpop.permute.xlu0 %451
        %v454 = vmul.f32 %v448, %v452
        %v455 = vmul.f32 %v449, %v452
        %v456 = vadd.f32 %v431, %v454
        %v457 = vadd.f32 %v432, %v455
        %458 = vrot.lane.b32.xlu0 %v390, 15
        %v459 = vpop.permute.xlu0 %458
        %460 = vrot.lane.b32.xlu0 %v392, 15
        %v461 = vpop.permute.xlu0 %460
        %vm462 = vcmp.lt.s32.totalorder %v411, 15
        %v463 = vsel %vm462, %v459, %v461
        %v464 = vsel %vm462, %v461, %v459
        %v465 = vlaneseq
        %v466 = vshrl.u32 %v465, 7
        %v467 = vsub.s32 2, %v466
        %v468 = vrot.slane %v395, %v467
        %v469 = vlaneseq
        %v470 = vshrl.u32 %v469, 7
        %v471 = vsub.s32 2, %v470
        %v472 = vrot.slane %v396, %v471
        %v473 = vmul.f32 %v464, %v468
        %v474 = vmul.f32 %v463, %v472
        %475 = vset.pattern.permute.xlu0 2
        %476 = vperm.xlu0 %475, %v394
        %v477 = vpop.permute.xlu0 %476
        %v479 = vmul.f32 %v473, %v477
        %v480 = vmul.f32 %v474, %v477
        %v481 = vadd.f32 %v456, %v479
        %v482 = vadd.f32 %v457, %v480
        %483 = vrot.lane.b32.xlu0 %v390, 1
        %v484 = vpop.permute.xlu0 %483
        %485 = vrot.lane.b32.xlu0 %v392, 1
        %v486 = vpop.permute.xlu0 %485
        %vm487 = vcmp.lt.s32.totalorder %v411, 1
        %v488 = vsel %vm487, %v484, %v486
        %v489 = vsel %vm487, %v486, %v484
        %v490 = vlaneseq
        %v491 = vshrl.u32 %v490, 7
        %v492 = vsub.s32 3, %v491
        %v493 = vrot.slane %v395, %v492
        %v494 = vlaneseq
        %v495 = vshrl.u32 %v494, 7
        %v496 = vsub.s32 3, %v495
        %v497 = vrot.slane %v396, %v496
        %v498 = vmul.f32 %v489, %v493
        %v499 = vmul.f32 %v488, %v497
        %500 = vset.pattern.permute.xlu0 3
        %501 = vperm.xlu0 %500, %v394
        %v502 = vpop.permute.xlu0 %501
        %v504 = vmul.f32 %v498, %v502
        %v505 = vmul.f32 %v499, %v502
        %v506 = vadd.f32 %v481, %v504
        %v507 = vadd.f32 %v482, %v505
        %508 = vrot.lane.b32.xlu0 %v390, 127
        %v509 = vpop.permute.xlu0 %508
        %510 = vrot.lane.b32.xlu0 %v392, 127
        %v511 = vpop.permute.xlu0 %510
        %vm512 = vcmp.lt.s32.totalorder %v411, 127
        %v513 = vsel %vm512, %v509, %v511
        %v514 = vsel %vm512, %v511, %v509
        %v515 = vlaneseq
        %v516 = vshrl.u32 %v515, 7
        %v517 = vsub.s32 5, %v516
        %v518 = vrot.slane %v395, %v517
        %v519 = vlaneseq
        %v520 = vshrl.u32 %v519, 7
        %v521 = vsub.s32 5, %v520
        %v522 = vrot.slane %v396, %v521
        %v523 = vmul.f32 %v513, %v518
        %v524 = vmul.f32 %v514, %v522
        %525 = vset.pattern.permute.xlu0 5
        %526 = vperm.xlu0 %525, %v394
        %v527 = vpop.permute.xlu0 %526
        %v529 = vmul.f32 %v523, %v527
        %v530 = vmul.f32 %v524, %v527
        %v531 = vadd.f32 %v506, %v529
        %v532 = vadd.f32 %v507, %v530
        %533 = vrot.lane.b32.xlu0 %v390, 113
        %v534 = vpop.permute.xlu0 %533
        %535 = vrot.lane.b32.xlu0 %v392, 113
        %v536 = vpop.permute.xlu0 %535
        %vm537 = vcmp.lt.s32.totalorder %v411, 113
        %v538 = vsel %vm537, %v534, %v536
        %v539 = vsel %vm537, %v536, %v534
        %v540 = vlaneseq
        %v541 = vshrl.u32 %v540, 7
        %v542 = vsub.s32 6, %v541
        %v543 = vrot.slane %v395, %v542
        %v544 = vlaneseq
        %v545 = vshrl.u32 %v544, 7
        %v546 = vsub.s32 6, %v545
        %v547 = vrot.slane %v396, %v546
        %v548 = vmul.f32 %v538, %v543
        %v549 = vmul.f32 %v539, %v547
        %550 = vset.pattern.permute.xlu0 6
        %551 = vperm.xlu0 %550, %v394
        %v552 = vpop.permute.xlu0 %551
        %v554 = vmul.f32 %v548, %v552
        %v555 = vmul.f32 %v549, %v552
        %v556 = vadd.f32 %v531, %v554
        %v557 = vadd.f32 %v532, %v555
        %558 = vrot.lane.b32.xlu0 %v390, 112
        %v559 = vpop.permute.xlu0 %558
        %560 = vrot.lane.b32.xlu0 %v392, 112
        %v561 = vpop.permute.xlu0 %560
        %vm562 = vcmp.lt.s32.totalorder %v411, 112
        %v563 = vsel %vm562, %v559, %v561
        %v564 = vsel %vm562, %v561, %v559
        %v565 = vlaneseq
        %v566 = vshrl.u32 %v565, 7
        %v567 = vsub.s32 7, %v566
        %v568 = vrot.slane %v395, %v567
        %v569 = vlaneseq
        %v570 = vshrl.u32 %v569, 7
        %v571 = vsub.s32 7, %v570
        %v572 = vrot.slane %v396, %v571
        %v573 = vmul.f32 %v563, %v568
        %v574 = vmul.f32 %v564, %v572
        %575 = vset.pattern.permute.xlu0 7
        %576 = vperm.xlu0 %575, %v394
        %v577 = vpop.permute.xlu0 %576
        %v579 = vmul.f32 %v573, %v577
        %v580 = vmul.f32 %v574, %v577
        %v581 = vadd.f32 %v556, %v579
        %v582 = vadd.f32 %v557, %v580
        %583 = vrot.lane.b32.xlu0 %v390, 111
        %v584 = vpop.permute.xlu0 %583
        %585 = vrot.lane.b32.xlu0 %v392, 111
        %v586 = vpop.permute.xlu0 %585
        %vm587 = vcmp.lt.s32.totalorder %v411, 111
        %v588 = vsel %vm587, %v584, %v586
        %v589 = vsel %vm587, %v586, %v584
        %v590 = vlaneseq
        %v591 = vshrl.u32 %v590, 7
        %v592 = vsub.s32 0, %v591
        %v593 = vrot.slane %v397, %v592
        %v594 = vlaneseq
        %v595 = vshrl.u32 %v594, 7
        %v596 = vsub.s32 0, %v595
        %v597 = vrot.slane %v398, %v596
        %v598 = vmul.f32 %v588, %v593
        %v599 = vmul.f32 %v589, %v597
        %600 = vset.pattern.permute.xlu0 8
        %601 = vperm.xlu0 %600, %v394
        %v602 = vpop.permute.xlu0 %601
        %v604 = vmul.f32 %v598, %v602
        %v605 = vmul.f32 %v599, %v602
        %v606 = vadd.f32 %v581, %v604
        %v607 = vadd.f32 %v582, %v605
        %v608 = vld [vmem:[%s4] sm:$0xff]
        %610 = vset.pattern.permute.xlu0 0
        %611 = vperm.xlu0 %610, %v608
        %v612 = vpop.permute.xlu0 %611
        %v614 = vadd.f32 %v606, %v612
        %v615 = vadd.f32 %v607, %v612
        %v616 = vmul.f32 %v614, 0.5
        %v617 = vmul.f32 %v615, 0.5
        %v618 = vmul.f32 %v614, 0.70710677
        %v619 = vmul.f32 %v615, 0.70710677
        %v620 = verf.f32.pop %v618
        %v621 = verf.f32.pop %v619
        %v622 = vadd.f32 %v620, 1.0
        %v623 = vadd.f32 %v621, 1.0
        %v624 = vmul.f32 %v616, %v622
        %v625 = vmul.f32 %v617, %v623
        %v626 = vld [vmem:[%s5] sm:$0xf]
        %v627 = vld [vmem:[%s6] sm:$0xf]
        %629 = vset.pattern.permute.xlu0 0
        %630 = vperm.xlu0 %629, %v627
        %v631 = vpop.permute.xlu0 %630
        %vm633 = vcmask 64512
        %v635 = vsel %vm633, %v626, 0
        %637 = vmatprep.subr.mxu0 %v625
        %638 = vmatpush1.msra.mxu0 %v624
        %639 = vmatprep.subr.mxu0 0.0
        %640 = vmatpush1.msra.mxu0 0.0
        %641 = vmatprep.subr.mxu0 0.0
        %642 = vmatpush1.msra.mxu0 0.0
        %643 = vmatprep.subr.mxu0 0.0
        %644 = vmatpush1.msra.mxu0 0.0
        %645 = vmatprep.subr.mxu0 0.0
        %646 = vmatpush1.msra.mxu0 0.0
        %647 = vmatprep.subr.mxu0 0.0
        %648 = vmatpush1.msra.mxu0 0.0
        %649 = vmatprep.subr.mxu0 0.0
        %650 = vmatpush1.msra.mxu0 0.0
        %651 = vmatprep.subr.mxu0 0.0
        %652 = vmatpush1.msra.mxu0 0.0
        %653 = vmatprep.subr.mxu0 0.0
        %654 = vmatpush1.msra.mxu0 0.0
        %655 = vmatprep.subr.mxu0 0.0
        %656 = vmatpush1.msra.mxu0 0.0
        %657 = vmatprep.subr.mxu0 0.0
        %658 = vmatpush1.msra.mxu0 0.0
        %659 = vmatprep.subr.mxu0 0.0
        %660 = vmatpush1.msra.mxu0 0.0
        %661 = vmatprep.subr.mxu0 0.0
        %662 = vmatpush1.msra.mxu0 0.0
        %663 = vmatprep.subr.mxu0 0.0
        %664 = vmatpush1.msra.mxu0 0.0
        %665 = vmatprep.subr.mxu0 0.0
        %666 = vmatpush1.msra.mxu0 0.0
        %667 = vmatprep.subr.mxu0 0.0
        %668 = vmatpush1.msra.mxu0 0.0
        %669 = vmatprep.subr.mxu0 0.0
        %670 = vmatpush1.msra.mxu0 0.0
        %671 = vmatprep.subr.mxu0 0.0
        %672 = vmatpush1.msra.mxu0 0.0
        %673 = vmatprep.subr.mxu0 0.0
        %674 = vmatpush1.msra.mxu0 0.0
        %675 = vmatprep.subr.mxu0 0.0
        %676 = vmatpush1.msra.mxu0 0.0
        %677 = vmatprep.subr.mxu0 0.0
        %678 = vmatpush1.msra.mxu0 0.0
        %679 = vmatprep.subr.mxu0 0.0
        %680 = vmatpush1.msra.mxu0 0.0
        %681 = vmatprep.subr.mxu0 0.0
        %682 = vmatpush1.msra.mxu0 0.0
        %683 = vmatprep.subr.mxu0 0.0
        %684 = vmatpush1.msra.mxu0 0.0
        %685 = vmatprep.subr.mxu0 0.0
        %686 = vmatpush1.msra.mxu0 0.0
        %687 = vmatprep.subr.mxu0 0.0
        %688 = vmatpush1.msra.mxu0 0.0
        %689 = vmatprep.subr.mxu0 0.0
        %690 = vmatpush1.msra.mxu0 0.0
        %691 = vmatprep.subr.mxu0 0.0
        %692 = vmatpush1.msra.mxu0 0.0
        %693 = vmatprep.subr.mxu0 0.0
        %694 = vmatpush1.msra.mxu0 0.0
        %695 = vmatprep.subr.mxu0 0.0
        %696 = vmatpush1.msra.mxu0 0.0
        %697 = vmatprep.subr.mxu0 0.0
        %698 = vmatpush1.msra.mxu0 0.0
        %699 = vmatprep.subr.mxu0 0.0
        %700 = vmatpush1.msra.mxu0 0.0
        %701 = vmatprep.mubr.f32.mxu0 0.0
        %702 = vmatmul.mubr.f32.gmra.mrb[0].mxu0 %v635
        %v703 = vpop.f32.mrb[0].mxu0
        %v704 = vadd.f32 %v631, %v703
        %v705 = vpop.f32.mrb[0].mxu0
        %v706 = vadd.f32 %v631, %v705
        %707 = vdwg.mxu0
        %v710 = vcombine.low %v704, %v706
        %712 = vst [vmem:[%s298] sm:$0xff] %v710
        %s713 = sand.u32 %s203, 1
        %s714 = scalar_lea.sflag [#allocation3], %s713
        %s715 = sand.u32 %s203, 1
        %s716 = smul.addr %s715, 8
        %s717 = scalar_lea.vmem [#allocation2], %s716
        // Predicated region
        $region53: #{tpu_custom_call.1} parent=51 // pred_check
          %p718 = pneg %p213
        $region54: #{tpu_custom_call.1} parent=51 // pred_check_branch
          %720 = sbr.rel (%p718) target = $region56
        $region55: #{tpu_custom_call.1} parent=51 // pred_region
          %s722 = ssub.s32 128, 128
          %723 = vsyncadd %s714, %s722
          %s724 = smul.addr %s22, 2
          %s725 = smul.addr %s724, 64
          %s726 = scalar_lea.hbm %s8, %s725
          %s728 = sshll.u32 %s717, 4
          %s729 = int_to_ptr.vmem [resolvable:$true] %s728
          %731 = dma.vmem_to_hbm [thread:$0]  %s729, 128, %s726, %s714
        $region56: #{tpu_custom_call.1} parent=51 // pred_fallthru
          _
      $region52: #{tpu_custom_call.1} parent=5 // pred_fallthru
        _
      %p732 = scmp.le.s32.totalorder 2, %s17
      // Predicated region
      $region57: #{tpu_custom_call.1} parent=5 // pred_check
        %p733 = pneg %p732
      $region58: #{tpu_custom_call.1} parent=5 // pred_check_branch
        %735 = sbr.rel (%p733) target = $region60
      $region59: #{tpu_custom_call.1} parent=5 // pred_region
        %s736 = ssub.s32 %s17, 2
        // Predicated region
        $region61: #{tpu_custom_call.1} parent=59 // pred_check
          %p737 = pneg %p219
        $region62: #{tpu_custom_call.1} parent=59 // pred_check_branch
          %739 = sbr.rel (%p737) target = $region64
        $region63: #{tpu_custom_call.1} parent=59 // pred_region
          %s740 = sand.u32 %s204, 1
          %s741 = scalar_lea.sflag [#allocation3], %s740
          %s742 = sand.u32 %s204, 1
          %s743 = smul.addr %s742, 8
          %s744 = scalar_lea.vmem [#allocation2], %s743
          %745 = dma.done %s741, 128
        $region64: #{tpu_custom_call.1} parent=59 // pred_fallthru
          _
      $region60: #{tpu_custom_call.1} parent=5 // pred_fallthru
        _
    $region6: #{tpu_custom_call.1} parent=1 // loop_footer
      %s21 = sadd.s32 1, %s17
    $region7: #{tpu_custom_call.1} parent=1 // loop_footer_branch
      %16 = sbr.rel target = $region3
    $region8: #{tpu_custom_call.1} parent=1 // loop_exit
      _
    %746 = vsyncpa [#allocation3], 1
    %s747 = scalar_lea.sflag [#allocation3], 1
    %748 = vsyncpa %s747, 1

</llo_original>
